<compile_context>
chip_gen: v7x
topology: tpu7x:2x2x1
jax: 0.10.0
libtpu: 0.0.40
codegen_flags: <defaults>
</compile_context>

<pallas_src>
import functools

import jax
import jax.numpy as jnp
import numpy as np
from jax.experimental import pallas as pl
from jax.experimental.pallas import tpu as pltpu


def _round_up(v, m):
    return ((v + m - 1) // m) * m


def _vmem_budget_bytes():
    """~85% of physical per-core VMEM; conservative (v7x) default off-TPU."""
    try:
        phys = int(pltpu.get_tpu_info().vmem_capacity_bytes)
    except Exception:
        phys = 64 * 1024 * 1024
    return int(phys * 0.85)


def _pad2(a, rows, cols):
    return jnp.pad(a, ((0, rows - a.shape[0]), (0, cols - a.shape[1])))


# ----------------------------------------------------------------------------
# Kernels
# ----------------------------------------------------------------------------
def _shared_head_kernel(x_ref, w1_ref, b1_ref, w2_ref, b2_ref,
                        w3_ref, b3_ref, w4_ref, b4_ref, o_ref):
    """Non-individual head, one row tile per grid step (weights resident).

    x_ref : (tm, nf)            bf16 row tile (streamed)
    wK_ref: (nf, nf)/(nf, twp)  resident (constant index_map, Buffered(1))
    bK_ref: (1, nf)/(1, twp)    resident
    o_ref : (tm, twp)           lane-dense (twp multiple of 128)
    """
    # Hoist bias reads/casts — read once per grid step, reuse.
    b1 = b1_ref[...].astype(jnp.float32)
    b2 = b2_ref[...].astype(jnp.float32)
    b3 = b3_ref[...].astype(jnp.float32)
    b4 = b4_ref[...].astype(jnp.float32)

    h = x_ref[...].astype(jnp.float32)

    def layer(h_f32, w_ref, b_f32):
        # bf16 x bf16 matmul with f32 accumulation on the MXU.
        y = jnp.dot(h_f32.astype(jnp.bfloat16),
                    w_ref[...].astype(jnp.bfloat16),
                    preferred_element_type=jnp.float32) + b_f32
        return jax.nn.relu(y) + h_f32          # residual in f32

    h = layer(h, w1_ref, b1)
    h = layer(h, w2_ref, b2)
    h = layer(h, w3_ref, b3)
    out = jnp.dot(h.astype(jnp.bfloat16), w4_ref[...].astype(jnp.bfloat16),
                  preferred_element_type=jnp.float32) + b4
    o_ref[...] = out.astype(o_ref.dtype)


def _linear_relu_res_kernel(x_ref, w_ref, b_ref, res_ref, o_ref, acc_ref):
    """K/N-tiled y = relu(x @ w + b) + res.  grid = (rows, out-cols, K)."""
    @pl.when(pl.program_id(2) == 0)
    def _():
        acc_ref[...] = jnp.zeros_like(acc_ref)
    acc_ref[...] += jnp.dot(x_ref[...].astype(jnp.bfloat16),
                            w_ref[...].astype(jnp.bfloat16),
                            preferred_element_type=jnp.float32)

    @pl.when(pl.program_id(2) == pl.num_programs(2) - 1)
    def _():
        y = acc_ref[...] + b_ref[...].astype(jnp.float32)
        o_ref[...] = (jax.nn.relu(y)
                      + res_ref[...].astype(jnp.float32)).astype(o_ref.dtype)


def _linear_kernel(x_ref, w_ref, b_ref, o_ref, acc_ref):
    """K/N-tiled y = x @ w + b.  grid = (rows, out-cols, K)."""
    @pl.when(pl.program_id(2) == 0)
    def _():
        acc_ref[...] = jnp.zeros_like(acc_ref)
    acc_ref[...] += jnp.dot(x_ref[...].astype(jnp.bfloat16),
                            w_ref[...].astype(jnp.bfloat16),
                            preferred_element_type=jnp.float32)

    @pl.when(pl.program_id(2) == pl.num_programs(2) - 1)
    def _():
        y = acc_ref[...] + b_ref[...].astype(jnp.float32)
        o_ref[...] = y.astype(o_ref.dtype)


def _individual_head_kernel(x_ref, w_ref, b_ref, o_ref, *, vg, nf, twp):
    """Individual head: a group of `vg` variables x a batch tile per step.

    x_ref : (tb, vg*nf)     per-variable slabs, 128-aligned lane slices
    w_ref : (vg, nf, twp)   per-variable weights
    b_ref : (vg, 1, twp)    per-variable bias
    o_ref : (tb, vg*twp)    lane-dense output slab
    """
    for i in range(vg):                       # small static unroll
        xi = x_ref[:, i * nf:(i + 1) * nf].astype(jnp.bfloat16)
        yi = (jnp.dot(xi, w_ref[i].astype(jnp.bfloat16),
                      preferred_element_type=jnp.float32)
              + b_ref[i].astype(jnp.float32))
        o_ref[:, i * twp:(i + 1) * twp] = yi.astype(o_ref.dtype)


# ----------------------------------------------------------------------------
# Shared head (individual=False)
# ----------------------------------------------------------------------------
@jax.jit
def _flatten_head_shared_resident(x, params):
    """Resident-weight fused path.  x: [B, n_vars, d_model, patch_num]."""
    B, n_vars, d_model, patch_num = x.shape
    nf = d_model * patch_num
    tw = params["w4"].shape[1]
    twp = _round_up(tw, 128)                  # lane-dense output width

    w4, b4 = params["w4"], params["b4"]
    if twp != tw:                             # pad final columns, slice later
        w4 = jnp.pad(w4, ((0, 0), (0, twp - tw)))
        b4 = jnp.pad(b4, ((0, 0), (0, twp - tw)))

    R = B * n_vars
    out_dtype = x.dtype
    x2d = x.reshape(R, nf).astype(jnp.bfloat16)   # Flatten + bf16 streaming

    budget = _vmem_budget_bytes()
    w_it = params["w1"].dtype.itemsize
    o_it = jnp.dtype(out_dtype).itemsize
    # Buffered(1) -> single resident copy of all weights + biases.
    w_bytes = ((3 * nf * nf + nf * twp) + (3 * nf + twp)) * w_it

    def io_bytes(t):                          # double-buffered streamed tiles
        return 2 * t * (nf * 2 + twp * o_it)

    margin = 2 << 20
    tm = min(512, R)
    while tm > 8 and w_bytes + io_bytes(tm) + margin > budget:
        tm //= 2
    if tm < R:
        tm = max(8, (tm // 8) * 8)            # multiple of 8
    else:
        tm = R                                # full dim is always legal
    # Note: if R % tm != 0 the last tile computes on padded rows; the partial
    # output store is masked by Pallas (correct, wastes a little compute).

    resident = lambda shape: pl.BlockSpec(shape, lambda i: (0, 0),
                                          pipeline_mode=pl.Buffered(1))

    out = pl.pallas_call(
        _shared_head_kernel,
        out_shape=jax.ShapeDtypeStruct((R, twp), out_dtype),
        grid=(pl.cdiv(R, tm),),
        in_specs=[
            pl.BlockSpec((tm, nf), lambda i: (i, 0)),      # streamed row tile
            resident((nf, nf)), resident((1, nf)),
            resident((nf, nf)), resident((1, nf)),
            resident((nf, nf)), resident((1, nf)),
            resident((nf, twp)), resident((1, twp)),
        ],
        out_specs=pl.BlockSpec((tm, twp), lambda i: (i, 0)),
        compiler_params=pltpu.CompilerParams(
            dimension_semantics=("parallel",),
            vmem_limit_bytes=int(budget)),
    )(x2d,
      params["w1"], params["b1"],
      params["w2"], params["b2"],
      params["w3"], params["b3"],
      w4, b4)
    return out[:, :tw].reshape(B, n_vars, tw)


def _tiled_linear(x, w, b, residual, vmem_limit):
    """One K/N-tiled linear layer (optionally fused relu+residual)."""
    R, K = x.shape
    _, N = w.shape
    tm = R if R <= 512 else 512               # mult of 8 or full dim
    tn = N if N <= 512 else 512               # mult of 128 or full dim
    tk = K if K <= 1024 else 1024             # mult of 128 or full dim
    grid = (pl.cdiv(R, tm), pl.cdiv(N, tn), pl.cdiv(K, tk))

    in_specs = [
        pl.BlockSpec((tm, tk), lambda i, j, k: (i, k)),
        pl.BlockSpec((tk, tn), lambda i, j, k: (k, j)),
        pl.BlockSpec((1, tn), lambda i, j, k: (0, j)),
    ]
    args = [x, w, b]
    if residual is not None:
        in_specs.append(pl.BlockSpec((tm, tn), lambda i, j, k: (i, j)))
        args.append(residual)
        kernel = _linear_relu_res_kernel
    else:
        kernel = _linear_kernel

    return pl.pallas_call(
        kernel,
        out_shape=jax.ShapeDtypeStruct((R, N), jnp.float32),
        grid=grid,
        in_specs=in_specs,
        out_specs=pl.BlockSpec((tm, tn), lambda i, j, k: (i, j)),
        scratch_shapes=[pltpu.VMEM((tm, tn), jnp.float32)],
        compiler_params=pltpu.CompilerParams(
            dimension_semantics=("parallel", "parallel", "arbitrary"),
            vmem_limit_bytes=int(vmem_limit)),
    )(*args)


@jax.jit
def flatten_head_shared_tiled(x, params):
    """Fallback path: per-layer K/N-tiled matmuls (weights too big for VMEM)."""
    B, n_vars, d_model, patch_num = x.shape
    nf = d_model * patch_num
    tw = params["w4"].shape[1]
    nfp = _round_up(nf, 128)
    twp = _round_up(tw, 128)
    R = B * n_vars
    budget = _vmem_budget_bytes()

    # bf16-round once (matches the resident path / reference), then zero-pad
    # nf -> nfp; padded columns stay exactly zero through all layers.
    x2d = x.reshape(R, nf).astype(jnp.bfloat16).astype(jnp.float32)
    x2d = jnp.pad(x2d, ((0, 0), (0, nfp - nf)))

    w1 = _pad2(params["w1"], nfp, nfp); b1 = _pad2(params["b1"], 1, nfp)
    w2 = _pad2(params["w2"], nfp, nfp); b2 = _pad2(params["b2"], 1, nfp)
    w3 = _pad2(params["w3"], nfp, nfp); b3 = _pad2(params["b3"], 1, nfp)
    w4 = _pad2(params["w4"], nfp, twp); b4 = _pad2(params["b4"], 1, twp)

    h = _tiled_linear(x2d, w1, b1, x2d, budget)
    h = _tiled_linear(h, w2, b2, h, budget)
    h = _tiled_linear(h, w3, b3, h, budget)
    out = _tiled_linear(h, w4, b4, None, budget)
    return out[:, :tw].astype(x.dtype).reshape(B, n_vars, tw)


def flatten_head_shared(x, params):
    """individual=False branch with static dispatch on the VMEM budget."""
    nf = x.shape[2] * x.shape[3]
    tw = params["w4"].shape[1]
    twp = _round_up(tw, 128)
    w_it = params["w1"].dtype.itemsize
    w_bytes = ((3 * nf * nf + nf * twp) + (3 * nf + twp)) * w_it
    min_io = 2 * 8 * (nf * 2 + twp * jnp.dtype(x.dtype).itemsize)
    if w_bytes + min_io + (2 << 20) <= _vmem_budget_bytes():
        return _flatten_head_shared_resident(x, params)
    return flatten_head_shared_tiled(x, params)


# ----------------------------------------------------------------------------
# Individual head (individual=True)
# ----------------------------------------------------------------------------
@jax.jit
def flatten_head_individual(x, params):
    """individual=True branch.  x: [B, n_vars, d_model, patch_num]."""
    B, n_vars, d_model, patch_num = x.shape
    nf = d_model * patch_num
    w, b = params["w"], params["b"]            # (n_vars, nf, tw), (n_vars, 1, tw)
    tw = w.shape[-1]
    twp = _round_up(tw, 128)
    nfp = _round_up(nf, 128)

    if twp != tw:
        w = jnp.pad(w, ((0, 0), (0, 0), (0, twp - tw)))
        b = jnp.pad(b, ((0, 0), (0, 0), (0, twp - tw)))
    if nfp != nf:                              # lane-align per-variable slabs
        w = jnp.pad(w, ((0, 0), (0, nfp - nf), (0, 0)))

    x3d = x.reshape(B, n_vars, nf)
    if nfp != nf:
        x3d = jnp.pad(x3d, ((0, 0), (0, 0), (0, nfp - nf)))
    x2d = x3d.reshape(B, n_vars * nfp)         # free reshape, no HBM transpose

    budget = _vmem_budget_bytes()
    x_it = jnp.dtype(x.dtype).itemsize
    w_it = w.dtype.itemsize
    o_it = x_it

    tb = B if B <= 256 else 256                # batch tile (mult of 8 or full)

    # Variables per grid step: largest divisor of n_vars (cap 32 to bound the
    # static unroll) whose double-buffered weights + IO tiles fit the budget.
    vg = 1
    for d in range(min(n_vars, 32), 0, -1):
        if n_vars % d:
            continue
        need = (2 * d * (nfp * twp + twp) * w_it
                + 2 * tb * d * (nfp * x_it + twp * o_it) + (2 << 20))
        if need <= budget:
            vg = d
            break
    n_groups = n_vars // vg
    n_btiles = pl.cdiv(B, tb)

    kernel = functools.partial(_individual_head_kernel, vg=vg, nf=nfp, twp=twp)
    out2d = pl.pallas_call(
        kernel,
        out_shape=jax.ShapeDtypeStruct((B, n_vars * twp), x.dtype),
        grid=(n_groups, n_btiles),             # btiles innermost: weights stay put
        in_specs=[
            pl.BlockSpec((tb, vg * nfp), lambda g, bt: (bt, g)),
            pl.BlockSpec((vg, nfp, twp), lambda g, bt: (g, 0, 0)),
            pl.BlockSpec((vg, 1, twp), lambda g, bt: (g, 0, 0)),
        ],
        out_specs=pl.BlockSpec((tb, vg * twp), lambda g, bt: (bt, g)),
        compiler_params=pltpu.CompilerParams(
            dimension_semantics=("parallel", "parallel"),
            vmem_limit_bytes=int(budget)),
    )(x2d, w, b)

    return out2d.reshape(B, n_vars, twp)[..., :tw]


# ----------------------------------------------------------------------------
# Deterministic parameter construction (mimics nn.Linear init shapes), bf16
# ----------------------------------------------------------------------------
def init_shared_params(key, nf, target_window, dtype=jnp.bfloat16):
    ks = jax.random.split(key, 8)
    bound = 1.0 / np.sqrt(nf)
    u = lambda k, shape: jax.random.uniform(k, shape, dtype, -bound, bound)
    # stored pre-transposed to (in, out) so the kernels feed the MXU directly
    return {
        "w1": u(ks[0], (nf, nf)), "b1": u(ks[1], (1, nf)),
        "w2": u(ks[2], (nf, nf)), "b2": u(ks[3], (1, nf)),
        "w3": u(ks[4], (nf, nf)), "b3": u(ks[5], (1, nf)),
        "w4": u(ks[6], (nf, target_window)), "b4": u(ks[7], (1, target_window)),
    }


def init_individual_params(key, n_vars, nf, target_window, dtype=jnp.bfloat16):
    k1, k2 = jax.random.split(key)
    bound = 1.0 / np.sqrt(nf)
    w = jax.random.uniform(k1, (n_vars, nf, target_window), dtype, -bound, bound)
    b = jax.random.uniform(k2, (n_vars, 1, target_window), dtype, -bound, bound)
    return {"w": w, "b": b}


# ----------------------------------------------------------------------------
# Pure-JAX references.  NOTE: all dots are f32 x f32 on bf16-rounded operands
# (mirrors the kernels' bf16-input / f32-accumulate matmuls and avoids the
# unsupported BF16 x BF16 = F32 DotThunk path on non-TPU backends).
# ----------------------------------------------------------------------------
def _bf(a):
    return a.astype(jnp.bfloat16).astype(jnp.float32)


def ref_shared(x, p):
    B, n_vars, d_model, patch_num = x.shape
    nf = d_model * patch_num
    h = _bf(x.reshape(B * n_vars, nf))

    def layer(h, w, bias):
        y = jnp.dot(_bf(h), w.astype(jnp.float32)) + bias.astype(jnp.float32)
        return jax.nn.relu(y) + h

    h = layer(h, p["w1"], p["b1"])
    h = layer(h, p["w2"], p["b2"])
    h = layer(h, p["w3"], p["b3"])
    out = (jnp.dot(_bf(h), p["w4"].astype(jnp.float32))
           + p["b4"].astype(jnp.float32))
    return out.reshape(B, n_vars, -1)


def ref_individual(x, p):
    B, n_vars, d_model, patch_num = x.shape
    h = _bf(x.reshape(B, n_vars, d_model * patch_num))
    y = jnp.einsum("bvn,vnt->bvt", h, p["w"].astype(jnp.float32))
    return y + jnp.transpose(p["b"].astype(jnp.float32), (1, 0, 2))


# ----------------------------------------------------------------------------
if __name__ == "__main__":
    key = jax.random.PRNGKey(0)
    kx, kp1, kp2 = jax.random.split(key, 3)

    # Small shapes consistent with the module: [B, n_vars, d_model, patch_num]
    B, n_vars, d_model, patch_num = 2, 4, 16, 8
    nf = d_model * patch_num          # 128
    target_window = 96

    x = jax.random.normal(kx, (B, n_vars, d_model, patch_num), jnp.float32)

    # --- individual = False (shared residual-MLP head, resident-weight path) ---
    p_shared = init_shared_params(kp1, nf, target_window)
    out_shared = flatten_head_shared(x, p_shared)
    jax.block_until_ready(out_shared)
    np.testing.assert_allclose(np.asarray(out_shared),
                               np.asarray(ref_shared(x, p_shared)),
                               rtol=2e-2, atol=2e-2)
    assert out_shared.shape == (B, n_vars, target_window)

    # --- also exercise the K/N-tiled fallback path (large-nf VMEM overflow) ---
    out_tiled = flatten_head_shared_tiled(x, p_shared)
    jax.block_until_ready(out_tiled)
    np.testing.assert_allclose(np.asarray(out_tiled),
                               np.asarray(ref_shared(x, p_shared)),
                               rtol=2e-2, atol=2e-2)

    # --- individual = True (per-variable linear head) ---
    p_ind = init_individual_params(kp2, n_vars, nf, target_window)
    out_ind = flatten_head_individual(x, p_ind)
    jax.block_until_ready(out_ind)
    np.testing.assert_allclose(np.asarray(out_ind),
                               np.asarray(ref_individual(x, p_ind)),
                               rtol=2e-2, atol=2e-2)
    assert out_ind.shape == (B, n_vars, target_window)

    print("KERNEL_OK")
</pallas_src>

<mosaic_0001>
module attributes {stable_mosaic.version = 11 : i64} {
  func.func @_shared_head_kernel(%arg0: i32, %arg1: memref<8x128xbf16, #tpu.memory_space<vmem>>, %arg2: memref<128x128xbf16, #tpu.memory_space<vmem>>, %arg3: memref<1x128xbf16, #tpu.memory_space<vmem>>, %arg4: memref<128x128xbf16, #tpu.memory_space<vmem>>, %arg5: memref<1x128xbf16, #tpu.memory_space<vmem>>, %arg6: memref<128x128xbf16, #tpu.memory_space<vmem>>, %arg7: memref<1x128xbf16, #tpu.memory_space<vmem>>, %arg8: memref<128x128xbf16, #tpu.memory_space<vmem>>, %arg9: memref<1x128xbf16, #tpu.memory_space<vmem>>, %arg10: memref<8x128xf32, #tpu.memory_space<vmem>>) attributes {dimension_semantics = [#tpu.dimension_semantics<parallel>], iteration_bounds = array<i64: 1>, scalar_prefetch = 0 : i64, scratch_operands = 0 : i64, tpu.core_type = #tpu.core_type<tc>, window_params = [{transform_indices = @transform_0, window_bounds = array<i64: 8, 128>}, {pipeline_mode = #tpu.pipeline_mode<synchronous>, transform_indices = @transform_1, window_bounds = array<i64: 128, 128>}, {pipeline_mode = #tpu.pipeline_mode<synchronous>, transform_indices = @transform_2, window_bounds = array<i64: 1, 128>}, {pipeline_mode = #tpu.pipeline_mode<synchronous>, transform_indices = @transform_3, window_bounds = array<i64: 128, 128>}, {pipeline_mode = #tpu.pipeline_mode<synchronous>, transform_indices = @transform_4, window_bounds = array<i64: 1, 128>}, {pipeline_mode = #tpu.pipeline_mode<synchronous>, transform_indices = @transform_5, window_bounds = array<i64: 128, 128>}, {pipeline_mode = #tpu.pipeline_mode<synchronous>, transform_indices = @transform_6, window_bounds = array<i64: 1, 128>}, {pipeline_mode = #tpu.pipeline_mode<synchronous>, transform_indices = @transform_7, window_bounds = array<i64: 128, 128>}, {pipeline_mode = #tpu.pipeline_mode<synchronous>, transform_indices = @transform_8, window_bounds = array<i64: 1, 128>}, {transform_indices = @transform_9, window_bounds = array<i64: 8, 128>}]} {
    %c0 = arith.constant 0 : index
    %c0_0 = arith.constant 0 : index
    %0 = vector.load %arg3[%c0, %c0_0] : memref<1x128xbf16, #tpu.memory_space<vmem>>, vector<1x128xbf16>
    %1 = arith.extf %0 : vector<1x128xbf16> to vector<1x128xf32>
    %c0_1 = arith.constant 0 : index
    %c0_2 = arith.constant 0 : index
    %2 = vector.load %arg5[%c0_1, %c0_2] : memref<1x128xbf16, #tpu.memory_space<vmem>>, vector<1x128xbf16>
    %3 = arith.extf %2 : vector<1x128xbf16> to vector<1x128xf32>
    %c0_3 = arith.constant 0 : index
    %c0_4 = arith.constant 0 : index
    %4 = vector.load %arg7[%c0_3, %c0_4] : memref<1x128xbf16, #tpu.memory_space<vmem>>, vector<1x128xbf16>
    %5 = arith.extf %4 : vector<1x128xbf16> to vector<1x128xf32>
    %c0_5 = arith.constant 0 : index
    %c0_6 = arith.constant 0 : index
    %6 = vector.load %arg9[%c0_5, %c0_6] : memref<1x128xbf16, #tpu.memory_space<vmem>>, vector<1x128xbf16>
    %7 = arith.extf %6 : vector<1x128xbf16> to vector<1x128xf32>
    %c0_7 = arith.constant 0 : index
    %c0_8 = arith.constant 0 : index
    %8 = vector.load %arg1[%c0_7, %c0_8] : memref<8x128xbf16, #tpu.memory_space<vmem>>, vector<8x128xbf16>
    %9 = arith.extf %8 : vector<8x128xbf16> to vector<8x128xf32>
    %10 = arith.truncf %9 : vector<8x128xf32> to vector<8x128xbf16>
    %c0_9 = arith.constant 0 : index
    %c0_10 = arith.constant 0 : index
    %11 = vector.load %arg2[%c0_9, %c0_10] : memref<128x128xbf16, #tpu.memory_space<vmem>>, vector<128x128xbf16>
    %cst = arith.constant dense<0.000000e+00> : vector<8x128xf32>
    %12 = tpu.matmul %10, %11, %cst {dimension_numbers = #tpu.dot_dimension_numbers<[1], [0], [0], [1], [0, 0, 1, 1], [], []>} : vector<8x128xbf16>, vector<128x128xbf16>, vector<8x128xf32> -> vector<8x128xf32>
    %13 = vector.broadcast %1 : vector<1x128xf32> to vector<8x128xf32>
    %14 = arith.addf %12, %13 : vector<8x128xf32>
    %cst_11 = arith.constant 0.000000e+00 : f32
    %15 = vector.broadcast %cst_11 : f32 to vector<8x128xf32>
    %16 = arith.maximumf %14, %15 : vector<8x128xf32>
    %17 = arith.addf %16, %9 : vector<8x128xf32>
    %18 = arith.truncf %17 : vector<8x128xf32> to vector<8x128xbf16>
    %c0_12 = arith.constant 0 : index
    %c0_13 = arith.constant 0 : index
    %19 = vector.load %arg4[%c0_12, %c0_13] : memref<128x128xbf16, #tpu.memory_space<vmem>>, vector<128x128xbf16>
    %cst_14 = arith.constant dense<0.000000e+00> : vector<8x128xf32>
    %20 = tpu.matmul %18, %19, %cst_14 {dimension_numbers = #tpu.dot_dimension_numbers<[1], [0], [0], [1], [0, 0, 1, 1], [], []>} : vector<8x128xbf16>, vector<128x128xbf16>, vector<8x128xf32> -> vector<8x128xf32>
    %21 = vector.broadcast %3 : vector<1x128xf32> to vector<8x128xf32>
    %22 = arith.addf %20, %21 : vector<8x128xf32>
    %cst_15 = arith.constant 0.000000e+00 : f32
    %23 = vector.broadcast %cst_15 : f32 to vector<8x128xf32>
    %24 = arith.maximumf %22, %23 : vector<8x128xf32>
    %25 = arith.addf %24, %17 : vector<8x128xf32>
    %26 = arith.truncf %25 : vector<8x128xf32> to vector<8x128xbf16>
    %c0_16 = arith.constant 0 : index
    %c0_17 = arith.constant 0 : index
    %27 = vector.load %arg6[%c0_16, %c0_17] : memref<128x128xbf16, #tpu.memory_space<vmem>>, vector<128x128xbf16>
    %cst_18 = arith.constant dense<0.000000e+00> : vector<8x128xf32>
    %28 = tpu.matmul %26, %27, %cst_18 {dimension_numbers = #tpu.dot_dimension_numbers<[1], [0], [0], [1], [0, 0, 1, 1], [], []>} : vector<8x128xbf16>, vector<128x128xbf16>, vector<8x128xf32> -> vector<8x128xf32>
    %29 = vector.broadcast %5 : vector<1x128xf32> to vector<8x128xf32>
    %30 = arith.addf %28, %29 : vector<8x128xf32>
    %cst_19 = arith.constant 0.000000e+00 : f32
    %31 = vector.broadcast %cst_19 : f32 to vector<8x128xf32>
    %32 = arith.maximumf %30, %31 : vector<8x128xf32>
    %33 = arith.addf %32, %25 : vector<8x128xf32>
    %34 = arith.truncf %33 : vector<8x128xf32> to vector<8x128xbf16>
    %c0_20 = arith.constant 0 : index
    %c0_21 = arith.constant 0 : index
    %35 = vector.load %arg8[%c0_20, %c0_21] : memref<128x128xbf16, #tpu.memory_space<vmem>>, vector<128x128xbf16>
    %cst_22 = arith.constant dense<0.000000e+00> : vector<8x128xf32>
    %36 = tpu.matmul %34, %35, %cst_22 {dimension_numbers = #tpu.dot_dimension_numbers<[1], [0], [0], [1], [0, 0, 1, 1], [], []>} : vector<8x128xbf16>, vector<128x128xbf16>, vector<8x128xf32> -> vector<8x128xf32>
    %37 = vector.broadcast %7 : vector<1x128xf32> to vector<8x128xf32>
    %38 = arith.addf %36, %37 : vector<8x128xf32>
    %c0_23 = arith.constant 0 : index
    %c0_24 = arith.constant 0 : index
    %39 = vector.load %arg10[%c0_23, %c0_24] : memref<8x128xf32, #tpu.memory_space<vmem>>, vector<8x128xf32>
    tpu.vector_store %arg10[%c0_23, %c0_24], %38 {strides = array<i32>} : memref<8x128xf32, #tpu.memory_space<vmem>>, vector<8x128xf32>,
    return
  }
  func.func @transform_0(%arg0: i32) -> (i32, i32) {
    %c0_i32 = arith.constant 0 : i32
    %c0_i32_0 = arith.constant 0 : i32
    return %arg0, %c0_i32 : i32, i32
  }
  func.func @transform_1(%arg0: i32) -> (i32, i32) {
    %c0_i32 = arith.constant 0 : i32
    %c0_i32_0 = arith.constant 0 : i32
    %c0_i32_1 = arith.constant 0 : i32
    return %c0_i32, %c0_i32_0 : i32, i32
  }
  func.func @transform_2(%arg0: i32) -> (i32, i32) {
    %c0_i32 = arith.constant 0 : i32
    %c0_i32_0 = arith.constant 0 : i32
    %c0_i32_1 = arith.constant 0 : i32
    return %c0_i32, %c0_i32_0 : i32, i32
  }
  func.func @transform_3(%arg0: i32) -> (i32, i32) {
    %c0_i32 = arith.constant 0 : i32
    %c0_i32_0 = arith.constant 0 : i32
    %c0_i32_1 = arith.constant 0 : i32
    return %c0_i32, %c0_i32_0 : i32, i32
  }
  func.func @transform_4(%arg0: i32) -> (i32, i32) {
    %c0_i32 = arith.constant 0 : i32
    %c0_i32_0 = arith.constant 0 : i32
    %c0_i32_1 = arith.constant 0 : i32
    return %c0_i32, %c0_i32_0 : i32, i32
  }
  func.func @transform_5(%arg0: i32) -> (i32, i32) {
    %c0_i32 = arith.constant 0 : i32
    %c0_i32_0 = arith.constant 0 : i32
    %c0_i32_1 = arith.constant 0 : i32
    return %c0_i32, %c0_i32_0 : i32, i32
  }
  func.func @transform_6(%arg0: i32) -> (i32, i32) {
    %c0_i32 = arith.constant 0 : i32
    %c0_i32_0 = arith.constant 0 : i32
    %c0_i32_1 = arith.constant 0 : i32
    return %c0_i32, %c0_i32_0 : i32, i32
  }
  func.func @transform_7(%arg0: i32) -> (i32, i32) {
    %c0_i32 = arith.constant 0 : i32
    %c0_i32_0 = arith.constant 0 : i32
    %c0_i32_1 = arith.constant 0 : i32
    return %c0_i32, %c0_i32_0 : i32, i32
  }
  func.func @transform_8(%arg0: i32) -> (i32, i32) {
    %c0_i32 = arith.constant 0 : i32
    %c0_i32_0 = arith.constant 0 : i32
    %c0_i32_1 = arith.constant 0 : i32
    return %c0_i32, %c0_i32_0 : i32, i32
  }
  func.func @transform_9(%arg0: i32) -> (i32, i32) {
    %c0_i32 = arith.constant 0 : i32
    %c0_i32_0 = arith.constant 0 : i32
    return %arg0, %c0_i32 : i32, i32
  }
}

</mosaic_0001>

<llo_original>
// kernel: _flatten_head_shared_resident.1
$region0: #{_flatten_head_shared_resident.1}
  #allocation0 [shape = 'u32[]', space=smem, size = 0x4, offset = 0x4, fixed_abs, tag = 'smem constant byte address 0x4 - core index']
  #allocation1 [shape = 'u32[144,128]{1,0:T(1,128)}', space=vmem, size = 0x12000, scoped, tag = 'internal scratch']
  %s0 = inlined_call_operand.vmem [shape: bf16[8,128], index: 0, kind: input, shape index: {}]
  %s1 = inlined_call_operand.vmem [shape: bf16[128,128], index: 1, kind: input, shape index: {}]
  %s2 = inlined_call_operand.vmem [shape: bf16[1,128], index: 2, kind: input, shape index: {}]
  %s3 = inlined_call_operand.vmem [shape: bf16[128,128], index: 3, kind: input, shape index: {}]
  %s4 = inlined_call_operand.vmem [shape: bf16[1,128], index: 4, kind: input, shape index: {}]
  %s5 = inlined_call_operand.vmem [shape: bf16[128,128], index: 5, kind: input, shape index: {}]
  %s6 = inlined_call_operand.vmem [shape: bf16[1,128], index: 6, kind: input, shape index: {}]
  %s7 = inlined_call_operand.vmem [shape: bf16[128,128], index: 7, kind: input, shape index: {}]
  %s8 = inlined_call_operand.vmem [shape: bf16[1,128], index: 8, kind: input, shape index: {}]
  %s9 = inlined_call_operand.hbm [shape: f32[8,128], index: 9, kind: output, shape index: {}]
  %s10 = sld [smem:[#allocation0]]
  $region46: #{_flatten_head_shared_resident.1} parent=0
    _
  %s12 = ssub.s32 1, %s10
  %s13 = scalar_select 0, %s12, %s10
  $region1: #{_flatten_head_shared_resident.1} parent=0
    #allocation2 [shape = 'u8[4096]{0}', space=vmem, size = 0x1000, scoped, tag = 'output window, operand 0, single buffered']
    #allocation3 [shape = 's32[1]{0}', space=sflag, size = 0x4, scoped, tag = 'scoped memory for _flatten_head_shared_resident.1']
    %14 = vsyncpa [#allocation3], 0
    // Predicated region
    $region2: #{_flatten_head_shared_resident.1} parent=1 // pred_check
      _
    $region3: #{_flatten_head_shared_resident.1} parent=1 // pred_check_branch
      %16 = sbr.rel (0) target = $region5
    $region4: #{_flatten_head_shared_resident.1} parent=1 // pred_region
      _
    $region5: #{_flatten_head_shared_resident.1} parent=1 // pred_fallthru
      _
    // Predicated region
    $region6: #{_flatten_head_shared_resident.1} parent=1 // pred_check
      _
    $region7: #{_flatten_head_shared_resident.1} parent=1 // pred_check_branch
      %18 = sbr.rel (0) target = $region9
    $region8: #{_flatten_head_shared_resident.1} parent=1 // pred_region
      _
    $region9: #{_flatten_head_shared_resident.1} parent=1 // pred_fallthru
      _
    // Predicated region
    $region10: #{_flatten_head_shared_resident.1} parent=1 // pred_check
      _
    $region11: #{_flatten_head_shared_resident.1} parent=1 // pred_check_branch
      %20 = sbr.rel (0) target = $region13
    $region12: #{_flatten_head_shared_resident.1} parent=1 // pred_region
      _
    $region13: #{_flatten_head_shared_resident.1} parent=1 // pred_fallthru
      _
    // Predicated region
    $region14: #{_flatten_head_shared_resident.1} parent=1 // pred_check
      _
    $region15: #{_flatten_head_shared_resident.1} parent=1 // pred_check_branch
      %22 = sbr.rel (0) target = $region17
    $region16: #{_flatten_head_shared_resident.1} parent=1 // pred_region
      _
    $region17: #{_flatten_head_shared_resident.1} parent=1 // pred_fallthru
      _
    // Predicated region
    $region18: #{_flatten_head_shared_resident.1} parent=1 // pred_check
      _
    $region19: #{_flatten_head_shared_resident.1} parent=1 // pred_check_branch
      %24 = sbr.rel (0) target = $region21
    $region20: #{_flatten_head_shared_resident.1} parent=1 // pred_region
      _
    $region21: #{_flatten_head_shared_resident.1} parent=1 // pred_fallthru
      _
    // Predicated region
    $region22: #{_flatten_head_shared_resident.1} parent=1 // pred_check
      _
    $region23: #{_flatten_head_shared_resident.1} parent=1 // pred_check_branch
      %26 = sbr.rel (0) target = $region25
    $region24: #{_flatten_head_shared_resident.1} parent=1 // pred_region
      _
    $region25: #{_flatten_head_shared_resident.1} parent=1 // pred_fallthru
      _
    // Predicated region
    $region26: #{_flatten_head_shared_resident.1} parent=1 // pred_check
      _
    $region27: #{_flatten_head_shared_resident.1} parent=1 // pred_check_branch
      %28 = sbr.rel (0) target = $region29
    $region28: #{_flatten_head_shared_resident.1} parent=1 // pred_region
      _
    $region29: #{_flatten_head_shared_resident.1} parent=1 // pred_fallthru
      _
    // Predicated region
    $region30: #{_flatten_head_shared_resident.1} parent=1 // pred_check
      _
    $region31: #{_flatten_head_shared_resident.1} parent=1 // pred_check_branch
      %30 = sbr.rel (0) target = $region33
    $region32: #{_flatten_head_shared_resident.1} parent=1 // pred_region
      _
    $region33: #{_flatten_head_shared_resident.1} parent=1 // pred_fallthru
      _
    // Predicated region
    $region34: #{_flatten_head_shared_resident.1} parent=1 // pred_check
      _
    $region35: #{_flatten_head_shared_resident.1} parent=1 // pred_check_branch
      %32 = sbr.rel (0) target = $region37
    $region36: #{_flatten_head_shared_resident.1} parent=1 // pred_region
      _
    $region37: #{_flatten_head_shared_resident.1} parent=1 // pred_fallthru
      _
    %v34 = vld [vmem:[%s2] sm:$0x1]
    %v35 = vunpack.c.l.bf16 %v34
    %v36 = vld [vmem:[%s4] sm:$0x1]
    %v37 = vunpack.c.l.bf16 %v36
    %v38 = vld [vmem:[%s6] sm:$0x1]
    %v39 = vunpack.c.l.bf16 %v38
    %v40 = vld [vmem:[%s8] sm:$0x1]
    %v41 = vunpack.c.l.bf16 %v40
    %v42 = vld [vmem:[%s0] sm:$0xf]
    %v43 = vunpack.c.l.bf16 %v42
    %v44 = vld [vmem:[%s1] sm:$0xf]
    %v45 = vld [vmem:[%s1 + $0x4] sm:$0xf]
    %v46 = vld [vmem:[%s1 + $0x8] sm:$0xf]
    %v47 = vld [vmem:[%s1 + $0xc] sm:$0xf]
    %v48 = vld [vmem:[%s1 + $0x10] sm:$0xf]
    %v49 = vld [vmem:[%s1 + $0x14] sm:$0xf]
    %v50 = vld [vmem:[%s1 + $0x18] sm:$0xf]
    %v51 = vld [vmem:[%s1 + $0x1c] sm:$0xf]
    %v52 = vld [vmem:[%s1 + $0x20] sm:$0xf]
    %v53 = vld [vmem:[%s1 + $0x24] sm:$0xf]
    %v54 = vld [vmem:[%s1 + $0x28] sm:$0xf]
    %v55 = vld [vmem:[%s1 + $0x2c] sm:$0xf]
    %v56 = vld [vmem:[%s1 + $0x30] sm:$0xf]
    %v57 = vld [vmem:[%s1 + $0x34] sm:$0xf]
    %v58 = vld [vmem:[%s1 + $0x38] sm:$0xf]
    %v59 = vld [vmem:[%s1 + $0x3c] sm:$0xf]
    %v60 = vlaneseq
    %v61 = vshrl.u32 %v60, 7
    %v62 = vsub.s32 0, %v61
    %v63 = vrot.slane %v35, %v62
    %v80 = vunpack.c.l.b16 %v44
    %v81 = vunpack.c.l.b16 %v45
    %v82 = vunpack.c.l.b16 %v46
    %v83 = vunpack.c.l.b16 %v47
    %v84 = vunpack.c.l.b16 %v48
    %v85 = vunpack.c.l.b16 %v49
    %v86 = vunpack.c.l.b16 %v50
    %v87 = vunpack.c.l.b16 %v51
    %v88 = vunpack.c.l.b16 %v52
    %v89 = vunpack.c.l.b16 %v53
    %v90 = vunpack.c.l.b16 %v54
    %v91 = vunpack.c.l.b16 %v55
    %v92 = vunpack.c.l.b16 %v56
    %v93 = vunpack.c.l.b16 %v57
    %v94 = vunpack.c.l.b16 %v58
    %v95 = vunpack.c.l.b16 %v59
    %v96 = vpack.c.b16 %v81, %v80
    %v97 = vpack.c.b16 %v83, %v82
    %v98 = vpack.c.b16 %v85, %v84
    %v99 = vpack.c.b16 %v87, %v86
    %v100 = vpack.c.b16 %v89, %v88
    %v101 = vpack.c.b16 %v91, %v90
    %v102 = vpack.c.b16 %v93, %v92
    %v103 = vpack.c.b16 %v95, %v94
    %112 = vmatprep.subr.bf16.mxu0 0
    %113 = vmatpush1.bf16.msra.mxu0 %v96
    %114 = vmatprep.subr.bf16.mxu0 0
    %115 = vmatpush1.bf16.msra.mxu0 %v97
    %116 = vmatprep.subr.bf16.mxu0 0
    %117 = vmatpush1.bf16.msra.mxu0 %v98
    %118 = vmatprep.subr.bf16.mxu0 0
    %119 = vmatpush1.bf16.msra.mxu0 %v99
    %120 = vmatprep.subr.bf16.mxu0 0
    %121 = vmatpush1.bf16.msra.mxu0 %v100
    %122 = vmatprep.subr.bf16.mxu0 0
    %123 = vmatpush1.bf16.msra.mxu0 %v101
    %124 = vmatprep.subr.bf16.mxu0 0
    %125 = vmatpush1.bf16.msra.mxu0 %v102
    %126 = vmatprep.subr.bf16.mxu0 0
    %127 = vmatpush1.bf16.msra.mxu0 %v103
    %128 = vmatprep.subr.bf16.mxu0 0
    %129 = vmatpush1.bf16.msra.mxu0 0
    %130 = vmatprep.subr.bf16.mxu0 0
    %131 = vmatpush1.bf16.msra.mxu0 0
    %132 = vmatprep.subr.bf16.mxu0 0
    %133 = vmatpush1.bf16.msra.mxu0 0
    %134 = vmatprep.subr.bf16.mxu0 0
    %135 = vmatpush1.bf16.msra.mxu0 0
    %136 = vmatprep.subr.bf16.mxu0 0
    %137 = vmatpush1.bf16.msra.mxu0 0
    %138 = vmatprep.subr.bf16.mxu0 0
    %139 = vmatpush1.bf16.msra.mxu0 0
    %140 = vmatprep.subr.bf16.mxu0 0
    %141 = vmatpush1.bf16.msra.mxu0 0
    %142 = vmatprep.subr.bf16.mxu0 0
    %143 = vmatpush1.bf16.msra.mxu0 0
    %144 = vmatprep.mubr.bf16.mxu0 0
    %145 = vmatmul.mubr.bf16.gmra.mrb[0].mxu0 %v42
    %v146 = vpop.f32.mrb[0].mxu0
    %v147 = vadd.f32 %v63, %v146
    %v148 = vpop.f32.mrb[0].mxu0
    %v149 = vpop.f32.mrb[0].mxu0
    %v150 = vpop.f32.mrb[0].mxu0
    %151 = vdwg.mxu0
    %v152 = vmax.f32 %v147, 0.0
    %v153 = vadd.f32 %v152, %v43
    %v154 = vpack.c.bf16 %v153, %v153
    %v155 = vld [vmem:[%s3] sm:$0xf]
    %v156 = vld [vmem:[%s3 + $0x4] sm:$0xf]
    %v157 = vld [vmem:[%s3 + $0x8] sm:$0xf]
    %v158 = vld [vmem:[%s3 + $0xc] sm:$0xf]
    %v159 = vld [vmem:[%s3 + $0x10] sm:$0xf]
    %v160 = vld [vmem:[%s3 + $0x14] sm:$0xf]
    %v161 = vld [vmem:[%s3 + $0x18] sm:$0xf]
    %v162 = vld [vmem:[%s3 + $0x1c] sm:$0xf]
    %v163 = vld [vmem:[%s3 + $0x20] sm:$0xf]
    %v164 = vld [vmem:[%s3 + $0x24] sm:$0xf]
    %v165 = vld [vmem:[%s3 + $0x28] sm:$0xf]
    %v166 = vld [vmem:[%s3 + $0x2c] sm:$0xf]
    %v167 = vld [vmem:[%s3 + $0x30] sm:$0xf]
    %v168 = vld [vmem:[%s3 + $0x34] sm:$0xf]
    %v169 = vld [vmem:[%s3 + $0x38] sm:$0xf]
    %v170 = vld [vmem:[%s3 + $0x3c] sm:$0xf]
    %v171 = vlaneseq
    %v172 = vshrl.u32 %v171, 7
    %v173 = vsub.s32 0, %v172
    %v174 = vrot.slane %v37, %v173
    %v191 = vunpack.c.l.b16 %v155
    %v192 = vunpack.c.l.b16 %v156
    %v193 = vunpack.c.l.b16 %v157
    %v194 = vunpack.c.l.b16 %v158
    %v195 = vunpack.c.l.b16 %v159
    %v196 = vunpack.c.l.b16 %v160
    %v197 = vunpack.c.l.b16 %v161
    %v198 = vunpack.c.l.b16 %v162
    %v199 = vunpack.c.l.b16 %v163
    %v200 = vunpack.c.l.b16 %v164
    %v201 = vunpack.c.l.b16 %v165
    %v202 = vunpack.c.l.b16 %v166
    %v203 = vunpack.c.l.b16 %v167
    %v204 = vunpack.c.l.b16 %v168
    %v205 = vunpack.c.l.b16 %v169
    %v206 = vunpack.c.l.b16 %v170
    %v207 = vpack.c.b16 %v192, %v191
    %v208 = vpack.c.b16 %v194, %v193
    %v209 = vpack.c.b16 %v196, %v195
    %v210 = vpack.c.b16 %v198, %v197
    %v211 = vpack.c.b16 %v200, %v199
    %v212 = vpack.c.b16 %v202, %v201
    %v213 = vpack.c.b16 %v204, %v203
    %v214 = vpack.c.b16 %v206, %v205
    %223 = vmatprep.subr.bf16.mxu0 0
    %224 = vmatpush1.bf16.msra.mxu0 %v207
    %225 = vmatprep.subr.bf16.mxu0 0
    %226 = vmatpush1.bf16.msra.mxu0 %v208
    %227 = vmatprep.subr.bf16.mxu0 0
    %228 = vmatpush1.bf16.msra.mxu0 %v209
    %229 = vmatprep.subr.bf16.mxu0 0
    %230 = vmatpush1.bf16.msra.mxu0 %v210
    %231 = vmatprep.subr.bf16.mxu0 0
    %232 = vmatpush1.bf16.msra.mxu0 %v211
    %233 = vmatprep.subr.bf16.mxu0 0
    %234 = vmatpush1.bf16.msra.mxu0 %v212
    %235 = vmatprep.subr.bf16.mxu0 0
    %236 = vmatpush1.bf16.msra.mxu0 %v213
    %237 = vmatprep.subr.bf16.mxu0 0
    %238 = vmatpush1.bf16.msra.mxu0 %v214
    %239 = vmatprep.subr.bf16.mxu0 0
    %240 = vmatpush1.bf16.msra.mxu0 0
    %241 = vmatprep.subr.bf16.mxu0 0
    %242 = vmatpush1.bf16.msra.mxu0 0
    %243 = vmatprep.subr.bf16.mxu0 0
    %244 = vmatpush1.bf16.msra.mxu0 0
    %245 = vmatprep.subr.bf16.mxu0 0
    %246 = vmatpush1.bf16.msra.mxu0 0
    %247 = vmatprep.subr.bf16.mxu0 0
    %248 = vmatpush1.bf16.msra.mxu0 0
    %249 = vmatprep.subr.bf16.mxu0 0
    %250 = vmatpush1.bf16.msra.mxu0 0
    %251 = vmatprep.subr.bf16.mxu0 0
    %252 = vmatpush1.bf16.msra.mxu0 0
    %253 = vmatprep.subr.bf16.mxu0 0
    %254 = vmatpush1.bf16.msra.mxu0 0
    %255 = vmatprep.mubr.bf16.mxu0 0
    %256 = vmatmul.mubr.bf16.gmra.mrb[0].mxu0 %v154
    %v257 = vpop.f32.mrb[0].mxu0
    %v258 = vadd.f32 %v174, %v257
    %v259 = vpop.f32.mrb[0].mxu0
    %v260 = vpop.f32.mrb[0].mxu0
    %v261 = vpop.f32.mrb[0].mxu0
    %262 = vdwg.mxu0
    %v263 = vmax.f32 %v258, 0.0
    %v264 = vadd.f32 %v263, %v153
    %v265 = vpack.c.bf16 %v264, %v264
    %v266 = vld [vmem:[%s5] sm:$0xf]
    %v267 = vld [vmem:[%s5 + $0x4] sm:$0xf]
    %v268 = vld [vmem:[%s5 + $0x8] sm:$0xf]
    %v269 = vld [vmem:[%s5 + $0xc] sm:$0xf]
    %v270 = vld [vmem:[%s5 + $0x10] sm:$0xf]
    %v271 = vld [vmem:[%s5 + $0x14] sm:$0xf]
    %v272 = vld [vmem:[%s5 + $0x18] sm:$0xf]
    %v273 = vld [vmem:[%s5 + $0x1c] sm:$0xf]
    %v274 = vld [vmem:[%s5 + $0x20] sm:$0xf]
    %v275 = vld [vmem:[%s5 + $0x24] sm:$0xf]
    %v276 = vld [vmem:[%s5 + $0x28] sm:$0xf]
    %v277 = vld [vmem:[%s5 + $0x2c] sm:$0xf]
    %v278 = vld [vmem:[%s5 + $0x30] sm:$0xf]
    %v279 = vld [vmem:[%s5 + $0x34] sm:$0xf]
    %v280 = vld [vmem:[%s5 + $0x38] sm:$0xf]
    %v281 = vld [vmem:[%s5 + $0x3c] sm:$0xf]
    %v282 = vlaneseq
    %v283 = vshrl.u32 %v282, 7
    %v284 = vsub.s32 0, %v283
    %v285 = vrot.slane %v39, %v284
    %v302 = vunpack.c.l.b16 %v266
    %v303 = vunpack.c.l.b16 %v267
    %v304 = vunpack.c.l.b16 %v268
    %v305 = vunpack.c.l.b16 %v269
    %v306 = vunpack.c.l.b16 %v270
    %v307 = vunpack.c.l.b16 %v271
    %v308 = vunpack.c.l.b16 %v272
    %v309 = vunpack.c.l.b16 %v273
    %v310 = vunpack.c.l.b16 %v274
    %v311 = vunpack.c.l.b16 %v275
    %v312 = vunpack.c.l.b16 %v276
    %v313 = vunpack.c.l.b16 %v277
    %v314 = vunpack.c.l.b16 %v278
    %v315 = vunpack.c.l.b16 %v279
    %v316 = vunpack.c.l.b16 %v280
    %v317 = vunpack.c.l.b16 %v281
    %v318 = vpack.c.b16 %v303, %v302
    %v319 = vpack.c.b16 %v305, %v304
    %v320 = vpack.c.b16 %v307, %v306
    %v321 = vpack.c.b16 %v309, %v308
    %v322 = vpack.c.b16 %v311, %v310
    %v323 = vpack.c.b16 %v313, %v312
    %v324 = vpack.c.b16 %v315, %v314
    %v325 = vpack.c.b16 %v317, %v316
    %334 = vmatprep.subr.bf16.mxu0 0
    %335 = vmatpush1.bf16.msra.mxu0 %v318
    %336 = vmatprep.subr.bf16.mxu0 0
    %337 = vmatpush1.bf16.msra.mxu0 %v319
    %338 = vmatprep.subr.bf16.mxu0 0
    %339 = vmatpush1.bf16.msra.mxu0 %v320
    %340 = vmatprep.subr.bf16.mxu0 0
    %341 = vmatpush1.bf16.msra.mxu0 %v321
    %342 = vmatprep.subr.bf16.mxu0 0
    %343 = vmatpush1.bf16.msra.mxu0 %v322
    %344 = vmatprep.subr.bf16.mxu0 0
    %345 = vmatpush1.bf16.msra.mxu0 %v323
    %346 = vmatprep.subr.bf16.mxu0 0
    %347 = vmatpush1.bf16.msra.mxu0 %v324
    %348 = vmatprep.subr.bf16.mxu0 0
    %349 = vmatpush1.bf16.msra.mxu0 %v325
    %350 = vmatprep.subr.bf16.mxu0 0
    %351 = vmatpush1.bf16.msra.mxu0 0
    %352 = vmatprep.subr.bf16.mxu0 0
    %353 = vmatpush1.bf16.msra.mxu0 0
    %354 = vmatprep.subr.bf16.mxu0 0
    %355 = vmatpush1.bf16.msra.mxu0 0
    %356 = vmatprep.subr.bf16.mxu0 0
    %357 = vmatpush1.bf16.msra.mxu0 0
    %358 = vmatprep.subr.bf16.mxu0 0
    %359 = vmatpush1.bf16.msra.mxu0 0
    %360 = vmatprep.subr.bf16.mxu0 0
    %361 = vmatpush1.bf16.msra.mxu0 0
    %362 = vmatprep.subr.bf16.mxu0 0
    %363 = vmatpush1.bf16.msra.mxu0 0
    %364 = vmatprep.subr.bf16.mxu0 0
    %365 = vmatpush1.bf16.msra.mxu0 0
    %366 = vmatprep.mubr.bf16.mxu0 0
    %367 = vmatmul.mubr.bf16.gmra.mrb[0].mxu0 %v265
    %v368 = vpop.f32.mrb[0].mxu0
    %v369 = vadd.f32 %v285, %v368
    %v370 = vpop.f32.mrb[0].mxu0
    %v371 = vpop.f32.mrb[0].mxu0
    %v372 = vpop.f32.mrb[0].mxu0
    %373 = vdwg.mxu0
    %v374 = vmax.f32 %v369, 0.0
    %v375 = vadd.f32 %v374, %v264
    %v376 = vpack.c.bf16 %v375, %v375
    %v377 = vld [vmem:[%s7] sm:$0xf]
    %v378 = vld [vmem:[%s7 + $0x4] sm:$0xf]
    %v379 = vld [vmem:[%s7 + $0x8] sm:$0xf]
    %v380 = vld [vmem:[%s7 + $0xc] sm:$0xf]
    %v381 = vld [vmem:[%s7 + $0x10] sm:$0xf]
    %v382 = vld [vmem:[%s7 + $0x14] sm:$0xf]
    %v383 = vld [vmem:[%s7 + $0x18] sm:$0xf]
    %v384 = vld [vmem:[%s7 + $0x1c] sm:$0xf]
    %v385 = vld [vmem:[%s7 + $0x20] sm:$0xf]
    %v386 = vld [vmem:[%s7 + $0x24] sm:$0xf]
    %v387 = vld [vmem:[%s7 + $0x28] sm:$0xf]
    %v388 = vld [vmem:[%s7 + $0x2c] sm:$0xf]
    %v389 = vld [vmem:[%s7 + $0x30] sm:$0xf]
    %v390 = vld [vmem:[%s7 + $0x34] sm:$0xf]
    %v391 = vld [vmem:[%s7 + $0x38] sm:$0xf]
    %v392 = vld [vmem:[%s7 + $0x3c] sm:$0xf]
    %v393 = vlaneseq
    %v394 = vshrl.u32 %v393, 7
    %v395 = vsub.s32 0, %v394
    %v396 = vrot.slane %v41, %v395
    %v413 = vunpack.c.l.b16 %v377
    %v414 = vunpack.c.l.b16 %v378
    %v415 = vunpack.c.l.b16 %v379
    %v416 = vunpack.c.l.b16 %v380
    %v417 = vunpack.c.l.b16 %v381
    %v418 = vunpack.c.l.b16 %v382
    %v419 = vunpack.c.l.b16 %v383
    %v420 = vunpack.c.l.b16 %v384
    %v421 = vunpack.c.l.b16 %v385
    %v422 = vunpack.c.l.b16 %v386
    %v423 = vunpack.c.l.b16 %v387
    %v424 = vunpack.c.l.b16 %v388
    %v425 = vunpack.c.l.b16 %v389
    %v426 = vunpack.c.l.b16 %v390
    %v427 = vunpack.c.l.b16 %v391
    %v428 = vunpack.c.l.b16 %v392
    %v429 = vpack.c.b16 %v414, %v413
    %v430 = vpack.c.b16 %v416, %v415
    %v431 = vpack.c.b16 %v418, %v417
    %v432 = vpack.c.b16 %v420, %v419
    %v433 = vpack.c.b16 %v422, %v421
    %v434 = vpack.c.b16 %v424, %v423
    %v435 = vpack.c.b16 %v426, %v425
    %v436 = vpack.c.b16 %v428, %v427
    %445 = vmatprep.subr.bf16.mxu0 0
    %446 = vmatpush1.bf16.msra.mxu0 %v429
    %447 = vmatprep.subr.bf16.mxu0 0
    %448 = vmatpush1.bf16.msra.mxu0 %v430
    %449 = vmatprep.subr.bf16.mxu0 0
    %450 = vmatpush1.bf16.msra.mxu0 %v431
    %451 = vmatprep.subr.bf16.mxu0 0
    %452 = vmatpush1.bf16.msra.mxu0 %v432
    %453 = vmatprep.subr.bf16.mxu0 0
    %454 = vmatpush1.bf16.msra.mxu0 %v433
    %455 = vmatprep.subr.bf16.mxu0 0
    %456 = vmatpush1.bf16.msra.mxu0 %v434
    %457 = vmatprep.subr.bf16.mxu0 0
    %458 = vmatpush1.bf16.msra.mxu0 %v435
    %459 = vmatprep.subr.bf16.mxu0 0
    %460 = vmatpush1.bf16.msra.mxu0 %v436
    %461 = vmatprep.subr.bf16.mxu0 0
    %462 = vmatpush1.bf16.msra.mxu0 0
    %463 = vmatprep.subr.bf16.mxu0 0
    %464 = vmatpush1.bf16.msra.mxu0 0
    %465 = vmatprep.subr.bf16.mxu0 0
    %466 = vmatpush1.bf16.msra.mxu0 0
    %467 = vmatprep.subr.bf16.mxu0 0
    %468 = vmatpush1.bf16.msra.mxu0 0
    %469 = vmatprep.subr.bf16.mxu0 0
    %470 = vmatpush1.bf16.msra.mxu0 0
    %471 = vmatprep.subr.bf16.mxu0 0
    %472 = vmatpush1.bf16.msra.mxu0 0
    %473 = vmatprep.subr.bf16.mxu0 0
    %474 = vmatpush1.bf16.msra.mxu0 0
    %475 = vmatprep.subr.bf16.mxu0 0
    %476 = vmatpush1.bf16.msra.mxu0 0
    %477 = vmatprep.mubr.bf16.mxu0 0
    %478 = vmatmul.mubr.bf16.gmra.mrb[0].mxu0 %v376
    %v479 = vpop.f32.mrb[0].mxu0
    %v480 = vadd.f32 %v396, %v479
    %v481 = vpop.f32.mrb[0].mxu0
    %v482 = vpop.f32.mrb[0].mxu0
    %v483 = vpop.f32.mrb[0].mxu0
    %484 = vdwg.mxu0
    %485 = vst [vmem:[#allocation2] sm:$0xff] %v480
    // Predicated region
    $region38: #{_flatten_head_shared_resident.1} parent=1 // pred_check
      _
    $region39: #{_flatten_head_shared_resident.1} parent=1 // pred_check_branch
      %487 = sbr.rel (0) target = $region41
    $region40: #{_flatten_head_shared_resident.1} parent=1 // pred_region
      %s489 = ssub.s32 128, 128
      %490 = vsyncadd [#allocation3], %s489
      %s492 = sshll.u32 [#allocation2], 4
      %s493 = int_to_ptr.vmem [resolvable:$true] %s492
      %495 = dma.vmem_to_hbm [thread:$0]  %s493, 128, %s9, [#allocation3]
    $region41: #{_flatten_head_shared_resident.1} parent=1 // pred_fallthru
      _
    // Predicated region
    $region42: #{_flatten_head_shared_resident.1} parent=1 // pred_check
      _
    $region43: #{_flatten_head_shared_resident.1} parent=1 // pred_check_branch
      %497 = sbr.rel (0) target = $region45
    $region44: #{_flatten_head_shared_resident.1} parent=1 // pred_region
      %498 = dma.done [#allocation3], 128
    $region45: #{_flatten_head_shared_resident.1} parent=1 // pred_fallthru
      _
    %499 = vsyncpa [#allocation3], 1

</llo_original>
